<compile_context>
chip_gen: v7x
topology: tpu7x:2x2x1
jax: 0.10.0
libtpu: 0.0.40
codegen_flags: <defaults>
</compile_context>

<pallas_src>
import functools

import jax
import jax.numpy as jnp
from jax.experimental import pallas as pl
from jax.experimental.pallas import tpu as pltpu


def _round_up(x: int, m: int) -> int:
    return (x + m - 1) // m * m


def _qfd2_kernel(d_ref, dpred_ref, a_ref, out_ref, *,
                 batch: int, tile_b: int, need_row_mask: bool, matmul_dtype):
    # Q = D - D_pred in the input dtype (bf16 stays bf16 for the MXU path).
    q = d_ref[...] - dpred_ref[...]                      # (tb, lp)

    # A is VMEM-resident (constant-index BlockSpec): no per-step rebuild cost.
    a = a_ref[...]                                       # (lp, lp)
    if matmul_dtype is not None:
        q_mm = q.astype(matmul_dtype)
        a = a.astype(matmul_dtype)
    else:
        q_mm = q

    # T = Q @ A on the MXU with f32 accumulation.
    t = jnp.dot(q_mm, a, preferred_element_type=jnp.float32)   # (tb, lp) f32

    # diag(Q A Q^T)[i] = sum_j T[i,j] * Q[i,j]; keepdims reductions only.
    per_row = jnp.sum(t * q.astype(jnp.float32), axis=-1, keepdims=True)  # (tb, 1)

    if need_row_mask:
        # Tail tile of a non-divisible batch grid: rows >= B hold unspecified
        # data (never read from valid HBM); zero their contribution.
        row = (jax.lax.broadcasted_iota(jnp.int32, per_row.shape, 0)
               + pl.program_id(0) * tile_b)
        per_row = jnp.where(row < batch, per_row, 0.0)

    partial = jnp.sum(per_row, axis=0, keepdims=True)           # (1, 1)

    # Lane-dense per-tile partial sum (unmasked full-lane store).
    out_ref[...] = jnp.broadcast_to(partial, out_ref.shape)     # (1, 1, 128)


def qfd2_loss(D: jax.Array, D_pred: jax.Array, *,
              matmul_dtype=None, tile_rows=None) -> jax.Array:
    """Pallas TPU QFD2Loss.forward (distance_matrix=None). Returns f32 loss."""
    assert D.shape == D_pred.shape and D.ndim == 2
    B, L = D.shape
    assert L >= 2, "QFD2 similarity matrix divides by (L - 1); need L >= 2"

    dtype = D.dtype
    dtype_bytes = jnp.dtype(dtype).itemsize
    sub = max(8, 32 // dtype_bytes)              # sublane packing granularity
    lp = _round_up(L, 128)                       # lane-dense class axis

    # Class axis: zero-pad to a lane multiple only when needed (common case
    # L % 128 == 0 does no copy).  Batch axis is never padded in HBM.
    if lp != L:
        D = jnp.pad(D, ((0, 0), (0, lp - L)))
        D_pred = jnp.pad(D_pred, ((0, 0), (0, lp - L)))

    # Batch tile: ~2 MiB of input per operand per tile, rounded to the dtype's
    # sublane packing.  Single-tile case uses tb == B (block dim == array dim,
    # always legal); multi-tile case masks the partial tail tile in-kernel.
    if tile_rows is not None:
        tb_cap = _round_up(max(int(tile_rows), sub), sub)
    else:
        tb_cap = _round_up(max(128, (2 << 20) // (lp * dtype_bytes)), sub)
    tb = B if B <= tb_cap else tb_cap
    g = pl.cdiv(B, tb)
    need_row_mask = (B % tb) != 0

    # A = 1 - |j-k| / (L-1): computed once in f32, cast like torch's
    # A.to(Q.dtype) (or to matmul_dtype when the reduced-precision flag is on).
    a_dtype = matmul_dtype if matmul_dtype is not None else dtype
    idx = jnp.arange(lp, dtype=jnp.float32)
    A = (1.0 - jnp.abs(idx[:, None] - idx[None, :]) / (L - 1)).astype(a_dtype)
    a_bytes = jnp.dtype(a_dtype).itemsize

    cost = pl.CostEstimate(
        flops=2 * g * tb * lp * lp + 3 * g * tb * lp,
        transcendentals=0,
        bytes_accessed=2 * B * lp * dtype_bytes + lp * lp * a_bytes + g * 128 * 4,
    )

    # VMEM budget: double-buffered input tiles + resident A (budget 2 buffers)
    # + f32 intermediates; generation-aware headroom (1/8 of capacity).
    vmem_est = (2 * 2 * tb * lp * dtype_bytes    # D, D_pred double-buffered
                + 2 * lp * lp * a_bytes          # A buffers
                + 4 * tb * lp * 4                # T, Q_f32, products
                + (1 << 20))                     # output blocks + slack
    try:
        vmem_cap = int(pltpu.get_tpu_info().vmem_capacity_bytes)
    except Exception:
        vmem_cap = 64 << 20                      # conservative (v7x per-core)
    vmem_cap = max(vmem_cap, 48 << 20)
    vmem_limit = int(min(max(2 * vmem_est, 32 << 20), vmem_cap - vmem_cap // 8))

    kernel = functools.partial(
        _qfd2_kernel, batch=B, tile_b=tb,
        need_row_mask=need_row_mask, matmul_dtype=matmul_dtype)

    partials = pl.pallas_call(
        kernel,
        out_shape=jax.ShapeDtypeStruct((g, 1, 128), jnp.float32),
        grid=(g,),
        in_specs=[
            pl.BlockSpec((tb, lp), lambda i: (i, 0)),   # D tile
            pl.BlockSpec((tb, lp), lambda i: (i, 0)),   # D_pred tile
            pl.BlockSpec((lp, lp), lambda i: (0, 0)),   # A: constant idx, resident
        ],
        out_specs=pl.BlockSpec((1, 1, 128), lambda i: (i, 0, 0)),
        compiler_params=pltpu.CompilerParams(
            dimension_semantics=("parallel",),
            vmem_limit_bytes=vmem_limit,
        ),
        cost_estimate=cost,
    )(D, D_pred, A)

    # One partial sum per batch tile (all lanes hold the same value, take lane
    # 0); mean over the *real* batch size, kept in f32.
    return jnp.sum(partials[:, 0, 0]) / B


def qfd2_loss_ref(D, D_pred):
    """Pure-JAX f32 reference matching the PyTorch module."""
    Q = (D - D_pred).astype(jnp.float32)
    L = D.shape[1]
    j = jnp.arange(L).reshape(L, 1)
    k = jnp.arange(L).reshape(1, L)
    A = 1.0 - jnp.abs(j - k).astype(jnp.float32) / (L - 1)
    result = Q @ A @ Q.T
    return jnp.mean(jnp.diagonal(result))


if __name__ == "__main__":
    key = jax.random.PRNGKey(0)

    # Small shapes consistent with the module (batch of distributions over L
    # classes): aligned/unaligned L, unaligned B, and a forced multi-tile run
    # that exercises the partial-tail row mask.
    cases = [
        ((8, 16), jnp.float32, None, 1e-5, 1e-6),
        ((10, 16), jnp.float32, None, 1e-5, 1e-6),     # B not sublane-aligned
        ((64, 128), jnp.float32, None, 1e-5, 1e-6),    # no-pad fast path
        ((200, 160), jnp.float32, None, 1e-5, 1e-6),
        ((200, 160), jnp.float32, 64, 1e-5, 1e-6),     # multi-tile + masked tail
        ((16, 32), jnp.bfloat16, None, 1e-1, 1e-3),    # bf16 input path
    ]
    for (B, L), dt, tile_rows, rtol, atol in cases:
        key, k1, k2 = jax.random.split(key, 3)
        D = jax.nn.softmax(jax.random.normal(k1, (B, L), jnp.float32), axis=-1)
        D_pred = jax.nn.softmax(jax.random.normal(k2, (B, L), jnp.float32), axis=-1)
        ref = jax.block_until_ready(qfd2_loss_ref(D, D_pred))

        loss = jax.block_until_ready(
            qfd2_loss(D.astype(dt), D_pred.astype(dt), tile_rows=tile_rows))
        assert jnp.allclose(loss, ref, rtol=rtol, atol=atol), \
            (B, L, str(dt), tile_rows, float(loss), float(ref))

    print("KERNEL_OK")
</pallas_src>

<mosaic_0001>
module attributes {stable_mosaic.version = 11 : i64} {
  func.func @_qfd2_kernel(%arg0: i32, %arg1: memref<8x128xf32, #tpu.memory_space<vmem>>, %arg2: memref<8x128xf32, #tpu.memory_space<vmem>>, %arg3: memref<128x128xf32, #tpu.memory_space<vmem>>, %arg4: memref<1x1x128xf32, #tpu.memory_space<vmem>>) attributes {dimension_semantics = [#tpu.dimension_semantics<parallel>], iteration_bounds = array<i64: 1>, scalar_prefetch = 0 : i64, scratch_operands = 0 : i64, tpu.core_type = #tpu.core_type<tc>, window_params = [{transform_indices = @transform_0, window_bounds = array<i64: 8, 128>}, {transform_indices = @transform_1, window_bounds = array<i64: 8, 128>}, {pipeline_mode = #tpu.pipeline_mode<synchronous>, transform_indices = @transform_2, window_bounds = array<i64: 128, 128>}, {transform_indices = @transform_3, window_bounds = array<i64: 1, 1, 128>}]} {
    %c0 = arith.constant 0 : index
    %c0_0 = arith.constant 0 : index
    %0 = vector.load %arg1[%c0, %c0_0] : memref<8x128xf32, #tpu.memory_space<vmem>>, vector<8x128xf32>
    %c0_1 = arith.constant 0 : index
    %c0_2 = arith.constant 0 : index
    %1 = vector.load %arg2[%c0_1, %c0_2] : memref<8x128xf32, #tpu.memory_space<vmem>>, vector<8x128xf32>
    %2 = arith.subf %0, %1 : vector<8x128xf32>
    %c0_3 = arith.constant 0 : index
    %c0_4 = arith.constant 0 : index
    %3 = vector.load %arg3[%c0_3, %c0_4] : memref<128x128xf32, #tpu.memory_space<vmem>>, vector<128x128xf32>
    %cst = arith.constant dense<0.000000e+00> : vector<8x128xf32>
    %4 = tpu.matmul %2, %3, %cst {dimension_numbers = #tpu.dot_dimension_numbers<[1], [0], [0], [1], [0, 0, 1, 1], [], []>} : vector<8x128xf32>, vector<128x128xf32>, vector<8x128xf32> -> vector<8x128xf32>
    %5 = arith.mulf %4, %2 : vector<8x128xf32>
    %cst_5 = arith.constant dense<0.000000e+00> : vector<8xf32>
    %6 = vector.multi_reduction <add>, %5, %cst_5 [1] : vector<8x128xf32> to vector<8xf32>
    %7 = vector.shape_cast %6 : vector<8xf32> to vector<8x1xf32>
    %cst_6 = arith.constant dense<0.000000e+00> : vector<1xf32>
    %8 = vector.multi_reduction <add>, %7, %cst_6 [0] : vector<8x1xf32> to vector<1xf32>
    %9 = vector.shape_cast %8 : vector<1xf32> to vector<1x1xf32>
    %10 = vector.shape_cast %9 : vector<1x1xf32> to vector<1x1x1xf32>
    %11 = vector.broadcast %10 : vector<1x1x1xf32> to vector<1x1x128xf32>
    %c0_7 = arith.constant 0 : index
    %c0_8 = arith.constant 0 : index
    %c0_9 = arith.constant 0 : index
    %12 = vector.load %arg4[%c0_7, %c0_8, %c0_9] : memref<1x1x128xf32, #tpu.memory_space<vmem>>, vector<1x1x128xf32>
    tpu.vector_store %arg4[%c0_7, %c0_8, %c0_9], %11 {strides = array<i32>} : memref<1x1x128xf32, #tpu.memory_space<vmem>>, vector<1x1x128xf32>,
    return
  }
  func.func @transform_0(%arg0: i32) -> (i32, i32) {
    %c0_i32 = arith.constant 0 : i32
    %c0_i32_0 = arith.constant 0 : i32
    return %arg0, %c0_i32 : i32, i32
  }
  func.func @transform_1(%arg0: i32) -> (i32, i32) {
    %c0_i32 = arith.constant 0 : i32
    %c0_i32_0 = arith.constant 0 : i32
    return %arg0, %c0_i32 : i32, i32
  }
  func.func @transform_2(%arg0: i32) -> (i32, i32) {
    %c0_i32 = arith.constant 0 : i32
    %c0_i32_0 = arith.constant 0 : i32
    %c0_i32_1 = arith.constant 0 : i32
    return %c0_i32, %c0_i32_0 : i32, i32
  }
  func.func @transform_3(%arg0: i32) -> (i32, i32, i32) {
    %c0_i32 = arith.constant 0 : i32
    %c0_i32_0 = arith.constant 0 : i32
    %c0_i32_1 = arith.constant 0 : i32
    return %arg0, %c0_i32, %c0_i32_0 : i32, i32, i32
  }
}

</mosaic_0001>

<llo_original>
// kernel: tpu_custom_call.1
$region0: #{tpu_custom_call.1}
  #allocation0 [shape = 'u32[]', space=smem, size = 0x4, offset = 0x4, fixed_abs, tag = 'smem constant byte address 0x4 - core index']
  #allocation1 [shape = 'u32[144,128]{1,0:T(1,128)}', space=vmem, size = 0x12000, scoped, tag = 'internal scratch']
  %s0 = inlined_call_operand.hbm [shape: f32[8,128], index: 0, kind: input, shape index: {}]
  %s1 = inlined_call_operand.hbm [shape: f32[8,128], index: 1, kind: input, shape index: {}]
  %s2 = inlined_call_operand.hbm [shape: f32[128,128], index: 2, kind: input, shape index: {}]
  %s3 = inlined_call_operand.hbm [shape: f32[1,1,128], index: 3, kind: output, shape index: {}]
  %s4 = sld [smem:[#allocation0]]
  $region34: #{tpu_custom_call.1} parent=0
    _
  %s6 = ssub.s32 1, %s4
  %s7 = scalar_select 0, %s6, %s4
  $region1: #{tpu_custom_call.1} parent=0
    #allocation2 [shape = 'u8[4096]{0}', space=vmem, size = 0x1000, scoped, tag = 'input window, operand 0, single buffered']
    #allocation3 [shape = 's32[1]{0}', space=sflag, size = 0x4, scoped, tag = 'scoped memory for tpu_custom_call.1']
    #allocation4 [shape = 's32[1]{0}', space=sflag, size = 0x4, scoped, tag = 'scoped memory for tpu_custom_call.1']
    #allocation5 [shape = 'u8[4096]{0}', space=vmem, size = 0x1000, scoped, tag = 'input window, operand 1, single buffered']
    #allocation6 [shape = 's32[1]{0}', space=sflag, size = 0x4, scoped, tag = 'scoped memory for tpu_custom_call.1']
    #allocation7 [shape = 'u8[65536]{0}', space=vmem, size = 0x10000, scoped, tag = 'input window, operand 2, single buffered']
    #allocation8 [shape = 'u8[512]{0}', space=vmem, size = 0x400, scoped, tag = 'output window, operand 0, single buffered']
    %8 = vsyncpa [#allocation3], 0
    %9 = vsyncpa [#allocation6], 0
    %10 = vsyncpa [#allocation4], 0
    // Predicated region
    $region2: #{tpu_custom_call.1} parent=1 // pred_check
      _
    $region3: #{tpu_custom_call.1} parent=1 // pred_check_branch
      %12 = sbr.rel (0) target = $region5
    $region4: #{tpu_custom_call.1} parent=1 // pred_region
      %s14 = ssub.s32 128, 128
      %15 = vsyncadd [#allocation3], %s14
      %s17 = sshll.u32 [#allocation2], 4
      %s18 = int_to_ptr.vmem [resolvable:$true] %s17
      %20 = dma.hbm_to_vmem [thread:$0]  %s0, 128, %s18, [#allocation3]
    $region5: #{tpu_custom_call.1} parent=1 // pred_fallthru
      _
    // Predicated region
    $region6: #{tpu_custom_call.1} parent=1 // pred_check
      _
    $region7: #{tpu_custom_call.1} parent=1 // pred_check_branch
      %22 = sbr.rel (0) target = $region9
    $region8: #{tpu_custom_call.1} parent=1 // pred_region
      %s24 = ssub.s32 128, 128
      %25 = vsyncadd [#allocation6], %s24
      %s27 = sshll.u32 [#allocation5], 4
      %s28 = int_to_ptr.vmem [resolvable:$true] %s27
      %30 = dma.hbm_to_vmem [thread:$0]  %s1, 128, %s28, [#allocation6]
    $region9: #{tpu_custom_call.1} parent=1 // pred_fallthru
      _
    // Predicated region
    $region10: #{tpu_custom_call.1} parent=1 // pred_check
      _
    $region11: #{tpu_custom_call.1} parent=1 // pred_check_branch
      %32 = sbr.rel (0) target = $region13
    $region12: #{tpu_custom_call.1} parent=1 // pred_region
      %s34 = ssub.s32 2048, 2048
      %35 = vsyncadd [#allocation6], %s34
      %s36 = sshll.u32 [#allocation7], 4
      %s37 = int_to_ptr.vmem [resolvable:$true] %s36
      %42 = dma.hbm_to_vmem [thread:$0]  %s2, 2048, %s37, [#allocation6], 128, 128, 8
    $region13: #{tpu_custom_call.1} parent=1 // pred_fallthru
      _
    // Predicated region
    $region14: #{tpu_custom_call.1} parent=1 // pred_check
      _
    $region15: #{tpu_custom_call.1} parent=1 // pred_check_branch
      %44 = sbr.rel (0) target = $region17
    $region16: #{tpu_custom_call.1} parent=1 // pred_region
      %45 = dma.done [#allocation3], 128
    $region17: #{tpu_custom_call.1} parent=1 // pred_fallthru
      _
    // Predicated region
    $region18: #{tpu_custom_call.1} parent=1 // pred_check
      _
    $region19: #{tpu_custom_call.1} parent=1 // pred_check_branch
      %47 = sbr.rel (0) target = $region21
    $region20: #{tpu_custom_call.1} parent=1 // pred_region
      %48 = dma.done [#allocation6], 128
    $region21: #{tpu_custom_call.1} parent=1 // pred_fallthru
      _
    // Predicated region
    $region22: #{tpu_custom_call.1} parent=1 // pred_check
      _
    $region23: #{tpu_custom_call.1} parent=1 // pred_check_branch
      %50 = sbr.rel (0) target = $region25
    $region24: #{tpu_custom_call.1} parent=1 // pred_region
      %51 = dma.done [#allocation6], 2048
    $region25: #{tpu_custom_call.1} parent=1 // pred_fallthru
      _
    %v52 = vld [vmem:[#allocation2] sm:$0xff]
    %v53 = vld [vmem:[#allocation5] sm:$0xff]
    %v54 = vsub.f32 %v52, %v53
    %v55 = vld [vmem:[#allocation7] sm:$0xff]
    %v56 = vld [vmem:[#allocation7 + $0x8] sm:$0xff]
    %v57 = vld [vmem:[#allocation7 + $0x10] sm:$0xff]
    %v58 = vld [vmem:[#allocation7 + $0x18] sm:$0xff]
    %v59 = vld [vmem:[#allocation7 + $0x20] sm:$0xff]
    %v60 = vld [vmem:[#allocation7 + $0x28] sm:$0xff]
    %v61 = vld [vmem:[#allocation7 + $0x30] sm:$0xff]
    %v62 = vld [vmem:[#allocation7 + $0x38] sm:$0xff]
    %v63 = vld [vmem:[#allocation7 + $0x40] sm:$0xff]
    %v64 = vld [vmem:[#allocation7 + $0x48] sm:$0xff]
    %v65 = vld [vmem:[#allocation7 + $0x50] sm:$0xff]
    %v66 = vld [vmem:[#allocation7 + $0x58] sm:$0xff]
    %v67 = vld [vmem:[#allocation7 + $0x60] sm:$0xff]
    %v68 = vld [vmem:[#allocation7 + $0x68] sm:$0xff]
    %v69 = vld [vmem:[#allocation7 + $0x70] sm:$0xff]
    %v70 = vld [vmem:[#allocation7 + $0x78] sm:$0xff]
    %71 = vmatprep.subr.mxu0 0.0
    %72 = vmatpush1.msra.mxu0 %v55
    %73 = vmatprep.subr.mxu0 0.0
    %74 = vmatpush1.msra.mxu0 %v56
    %75 = vmatprep.subr.mxu0 0.0
    %76 = vmatpush1.msra.mxu0 %v57
    %77 = vmatprep.subr.mxu0 0.0
    %78 = vmatpush1.msra.mxu0 %v58
    %79 = vmatprep.subr.mxu0 0.0
    %80 = vmatpush1.msra.mxu0 %v59
    %81 = vmatprep.subr.mxu0 0.0
    %82 = vmatpush1.msra.mxu0 %v60
    %83 = vmatprep.subr.mxu0 0.0
    %84 = vmatpush1.msra.mxu0 %v61
    %85 = vmatprep.subr.mxu0 0.0
    %86 = vmatpush1.msra.mxu0 %v62
    %87 = vmatprep.subr.mxu0 0.0
    %88 = vmatpush1.msra.mxu0 %v63
    %89 = vmatprep.subr.mxu0 0.0
    %90 = vmatpush1.msra.mxu0 %v64
    %91 = vmatprep.subr.mxu0 0.0
    %92 = vmatpush1.msra.mxu0 %v65
    %93 = vmatprep.subr.mxu0 0.0
    %94 = vmatpush1.msra.mxu0 %v66
    %95 = vmatprep.subr.mxu0 0.0
    %96 = vmatpush1.msra.mxu0 %v67
    %97 = vmatprep.subr.mxu0 0.0
    %98 = vmatpush1.msra.mxu0 %v68
    %99 = vmatprep.subr.mxu0 0.0
    %100 = vmatpush1.msra.mxu0 %v69
    %101 = vmatprep.subr.mxu0 0.0
    %102 = vmatpush1.msra.mxu0 %v70
    %103 = vmatprep.subr.mxu0 0.0
    %104 = vmatpush1.msra.mxu0 0.0
    %105 = vmatprep.subr.mxu0 0.0
    %106 = vmatpush1.msra.mxu0 0.0
    %107 = vmatprep.subr.mxu0 0.0
    %108 = vmatpush1.msra.mxu0 0.0
    %109 = vmatprep.subr.mxu0 0.0
    %110 = vmatpush1.msra.mxu0 0.0
    %111 = vmatprep.subr.mxu0 0.0
    %112 = vmatpush1.msra.mxu0 0.0
    %113 = vmatprep.subr.mxu0 0.0
    %114 = vmatpush1.msra.mxu0 0.0
    %115 = vmatprep.subr.mxu0 0.0
    %116 = vmatpush1.msra.mxu0 0.0
    %117 = vmatprep.subr.mxu0 0.0
    %118 = vmatpush1.msra.mxu0 0.0
    %119 = vmatprep.subr.mxu0 0.0
    %120 = vmatpush1.msra.mxu0 0.0
    %121 = vmatprep.subr.mxu0 0.0
    %122 = vmatpush1.msra.mxu0 0.0
    %123 = vmatprep.subr.mxu0 0.0
    %124 = vmatpush1.msra.mxu0 0.0
    %125 = vmatprep.subr.mxu0 0.0
    %126 = vmatpush1.msra.mxu0 0.0
    %127 = vmatprep.subr.mxu0 0.0
    %128 = vmatpush1.msra.mxu0 0.0
    %129 = vmatprep.subr.mxu0 0.0
    %130 = vmatpush1.msra.mxu0 0.0
    %131 = vmatprep.subr.mxu0 0.0
    %132 = vmatpush1.msra.mxu0 0.0
    %133 = vmatprep.subr.mxu0 0.0
    %134 = vmatpush1.msra.mxu0 0.0
    %135 = vmatprep.mubr.f32.mxu0 0.0
    %136 = vmatmul.mubr.f32.gmra.mrb[0].mxu0 %v54
    %v137 = vpop.f32.mrb[0].mxu0
    %v138 = vadd.f32 0.0, %v137
    %v139 = vpop.f32.mrb[0].mxu0
    %140 = vdwg.mxu0
    %v141 = vmul.f32 %v138, %v54
    %142 = vadd.xlane.f32.xlu0 %v141
    %v143 = vpop.xlane.xlu0 %142
    %v144 = vrot.slane %v143, 4
    %v145 = vadd.f32 %v143, %v144
    %v146 = vrot.slane %v145, 2
    %v147 = vadd.f32 %v145, %v146
    %v148 = vrot.slane %v147, 1
    %v149 = vadd.f32 %v147, %v148
    %150 = vst [vmem:[#allocation8] sm:$0x1] %v149
    // Predicated region
    $region26: #{tpu_custom_call.1} parent=1 // pred_check
      _
    $region27: #{tpu_custom_call.1} parent=1 // pred_check_branch
      %152 = sbr.rel (0) target = $region29
    $region28: #{tpu_custom_call.1} parent=1 // pred_region
      %s154 = ssub.s32 16, 16
      %155 = vsyncadd [#allocation4], %s154
      %s157 = sshll.u32 [#allocation8], 4
      %s158 = int_to_ptr.vmem [resolvable:$true] %s157
      %160 = dma.vmem_to_hbm [thread:$0]  %s158, 16, %s3, [#allocation4]
    $region29: #{tpu_custom_call.1} parent=1 // pred_fallthru
      _
    // Predicated region
    $region30: #{tpu_custom_call.1} parent=1 // pred_check
      _
    $region31: #{tpu_custom_call.1} parent=1 // pred_check_branch
      %162 = sbr.rel (0) target = $region33
    $region32: #{tpu_custom_call.1} parent=1 // pred_region
      %163 = dma.done [#allocation4], 16
    $region33: #{tpu_custom_call.1} parent=1 // pred_fallthru
      _
    %164 = vsyncpa [#allocation3], 1
    %165 = vsyncpa [#allocation6], 1
    %166 = vsyncpa [#allocation4], 1

</llo_original>
